<compile_context>
chip_gen: v7x
topology: tpu7x:2x2x1
jax: 0.10.0
libtpu: 0.0.40
codegen_flags: <defaults>
</compile_context>

<pallas_src>
from functools import lru_cache

import numpy as np
import jax
import jax.numpy as jnp
from jax import lax
from jax.experimental import pallas as pl
from jax.experimental.pallas import tpu as pltpu


# ----------------------------------------------------------------------------
# Pallas kernel: cosine-sim Gram + BCE-with-logits mean loss, one sample/grid step
# ----------------------------------------------------------------------------
def char_loss_kernel(m_ref, x_ref, idc_ref, idr_ref, out_ref):
    # m_ref  : [B]          int32 SMEM (scalar prefetch) — valid rows per sample
    # x_ref  : (1, Mp, Dp)  f32   VMEM — selected token features, zero padded
    # idc_ref: (1, Mp, 1)   int32 VMEM — name ids (column), -1 on padding
    # idr_ref: (1, 1, Mp)   int32 VMEM — name ids (row),    -2 on padding
    # out_ref: (1, 1, 128)  f32   VMEM — per-sample loss broadcast over lanes
    b = pl.program_id(0)
    m = m_ref[b]                                    # int32 scalar

    x = x_ref[0]                                    # (Mp, Dp)

    # Gram matrix on the MXU: dots[i, j] = <x_i, x_j>
    dots = lax.dot_general(
        x, x,
        dimension_numbers=(((1,), (1,)), ((), ())),
        preferred_element_type=jnp.float32,
    )                                               # (Mp, Mp)

    Mp = dots.shape[0]
    row_i = lax.broadcasted_iota(jnp.int32, (Mp, Mp), 0)
    col_j = lax.broadcasted_iota(jnp.int32, (Mp, Mp), 1)

    # Squared norms from the Gram diagonal (reuse the matmul result).
    diag = jnp.where(row_i == col_j, dots, 0.0)
    sq_col = jnp.sum(diag, axis=1, keepdims=True)   # (Mp, 1)  ||x_i||^2
    sq_row = jnp.sum(diag, axis=0, keepdims=True)   # (1, Mp)  ||x_j||^2

    # Cosine similarity, eps = 1e-8 (torch.nn.CosineSimilarity); per-row clamp.
    eps2 = jnp.float32(1e-16)
    inv_col = lax.rsqrt(jnp.maximum(sq_col, eps2))  # EUP, (Mp, 1)
    inv_row = lax.rsqrt(jnp.maximum(sq_row, eps2))  # EUP, (1, Mp)
    sim = dots * inv_col * inv_row                  # logits, (Mp, Mp)

    # target[i, j] = 1.0 iff same resolved character name (built in-kernel).
    tgt = (idc_ref[0] == idr_ref[0]).astype(jnp.float32)   # (Mp, Mp)

    # BCEWithLogitsLoss elementwise: max(x,0) - x*y + log(1 + exp(-|x|))
    l = jnp.maximum(sim, 0.0) - sim * tgt + jnp.log1p(jnp.exp(-jnp.abs(sim)))

    # Mask padded rows/cols with iota compares; mean divides by exact M^2.
    valid = (row_i < m) & (col_j < m)
    lm = jnp.where(valid, l, 0.0)
    num = jnp.sum(jnp.sum(lm, axis=1, keepdims=True), axis=0, keepdims=True)  # (1,1)

    mf = m.astype(jnp.float32)
    loss = num / (mf * mf)

    out_ref[...] = jnp.broadcast_to(loss.reshape(1, 1, 1), (1, 1, 128))


def _round_up(v, k):
    return ((v + k - 1) // k) * k


@lru_cache(maxsize=None)
def _build_char_loss_call(B, Mp, Dp):
    """Build (and cache) the batched pallas_call for a given (B, Mp, Dp) bucket."""
    grid_spec = pltpu.PrefetchScalarGridSpec(
        num_scalar_prefetch=1,                      # m_arr: [B] int32 -> SMEM
        grid=(B,),
        in_specs=[
            pl.BlockSpec((1, Mp, Dp), lambda b, m: (b, 0, 0)),   # x
            pl.BlockSpec((1, Mp, 1),  lambda b, m: (b, 0, 0)),   # ids column
            pl.BlockSpec((1, 1, Mp),  lambda b, m: (b, 0, 0)),   # ids row
        ],
        out_specs=pl.BlockSpec((1, 1, 128), lambda b, m: (b, 0, 0)),
    )
    call = pl.pallas_call(
        char_loss_kernel,
        out_shape=jax.ShapeDtypeStruct((B, 1, 128), jnp.float32),
        grid_spec=grid_spec,
        compiler_params=pltpu.CompilerParams(
            dimension_semantics=("parallel",)),      # batch axis -> 2 TCs on v7x
    )
    return jax.jit(lambda m, x, idc, idr: call(m, x, idc, idr)[:, 0, 0])


def character_loss_batch_pallas(x_list, ids_list):
    """x_list[b]: [M_b, D] f32 selected rows; ids_list[b]: [M_b] int32 name ids.
       Returns np.ndarray [B] of losses (0.0 for samples with M_b == 0)."""
    B = len(x_list)
    losses = np.zeros((B,), np.float32)
    keep = [b for b in range(B) if x_list[b].shape[0] > 0]
    if not keep:
        return losses

    D = x_list[keep[0]].shape[1]
    max_m = max(x_list[b].shape[0] for b in keep)
    Mp = max(8, pl.next_power_of_2(int(max_m)))      # bucketed -> stable compiles
    Dp = max(128, _round_up(D, 128))

    K = len(keep)
    x_pad = np.zeros((K, Mp, Dp), np.float32)
    idc = np.full((K, Mp, 1), -1, np.int32)          # distinct fills so padded
    idr = np.full((K, 1, Mp), -2, np.int32)          # pairs can never "match"
    m_arr = np.zeros((K,), np.int32)
    for k, b in enumerate(keep):
        M = x_list[b].shape[0]
        x_pad[k, :M, :D] = np.asarray(x_list[b], np.float32)
        idc[k, :M, 0] = ids_list[b]
        idr[k, 0, :M] = ids_list[b]
        m_arr[k] = M

    call = _build_char_loss_call(K, Mp, Dp)
    out = call(jnp.asarray(m_arr), jnp.asarray(x_pad),
               jnp.asarray(idc), jnp.asarray(idr))
    out = np.asarray(jax.block_until_ready(out))
    for k, b in enumerate(keep):
        losses[b] = out[k]
    return losses


# ----------------------------------------------------------------------------
# Host-side glue replicating CharacterLoss string/index logic
# ----------------------------------------------------------------------------
# Synthetic, deterministic name list (the PyTorch module loads ./name.json;
# defined in-script since this is a self-contained synthetic kernel).
NAME_LIST = ["Sheldon", "Penny", "Leonard", "Howard", "Raj", "Amy", "Bernadette"]
NAME_LIST_LOWER = [n.lower() for n in NAME_LIST]
NAME_TO_ID = {n: i for i, n in enumerate(NAME_LIST_LOWER)}


def find_pos_cur(token, i):
    while True:
        i = i - 1
        if i == -1:
            return -1
        if token[i] in NAME_LIST_LOWER and token[i + 1] == ':':
            return i


def find_pos_prev(token, i):
    sw = 0
    while True:
        i = i - 1
        if i == -1:
            return -1
        if sw == 1 and token[i] in NAME_LIST_LOWER and token[i + 1] == ':':
            return i
        if sw == 0 and token[i] in NAME_LIST_LOWER and token[i + 1] == ':':
            sw = 1


def _resolve_tokens(token, use_youI):
    token = list(token)
    if use_youI:
        for i in range(len(token)):
            if token[i] == 'me' or token[i] == 'i':
                p = find_pos_cur(token, i)
                if p >= 0:
                    token[i] = token[p]
            if token[i] == 'you':
                p = find_pos_prev(token, i)
                if p >= 0:
                    token[i] = token[p]
    return token


def _select_character_tokens(data_np, token, use_youI):
    """Returns (x_sel [M,D] f32, ids [M] int32, resolved tokens)."""
    token = _resolve_tokens(token, use_youI)
    idx = [i for i in range(data_np.shape[0]) if token[i] in NAME_TO_ID]
    if not idx:
        return (np.zeros((0, data_np.shape[1]), np.float32),
                np.zeros((0,), np.int32), token)
    ids = np.array([NAME_TO_ID[token[i]] for i in idx], np.int32)
    x_sel = np.asarray(data_np, np.float32)[np.array(idx)]
    return x_sel, ids, token


def character_loss_forward(data, token, use_youI=True):
    """Mirrors CharacterLoss.forward for a single (data, token) pair."""
    x_sel, ids, _ = _select_character_tokens(np.asarray(data), list(token), use_youI)
    if x_sel.shape[0] == 0:
        return np.float32(0.0)
    return character_loss_batch_pallas([x_sel], [ids])[0]


# ----------------------------------------------------------------------------
if __name__ == "__main__":
    key = jax.random.PRNGKey(0)
    k0, k1 = jax.random.split(key)
    D = 32
    data0 = jax.random.normal(k0, (16, D), dtype=jnp.float32)
    data1 = jax.random.normal(k1, (12, D), dtype=jnp.float32)

    tokens0 = ["sheldon", ":", "i", "think", "penny", "likes", "leonard", ".",
               "penny", ":", "you", "and", "me", "should", "talk", "."]
    tokens1 = ["howard", ":", "raj", "and", "i", "met", "amy", ".",
               "amy", ":", "you", "did"]
    assert len(tokens0) == data0.shape[0] and len(tokens1) == data1.shape[0]

    data_np = [np.asarray(data0), np.asarray(data1)]
    token_lists = [tokens0, tokens1]

    # Batched Pallas forward: both utterances in ONE pallas_call (grid=(2,)).
    sels = [_select_character_tokens(data_np[b], token_lists[b], True)
            for b in range(2)]
    losses = character_loss_batch_pallas([s[0] for s in sels], [s[1] for s in sels])

    # Pure-numpy reference (same math as the PyTorch module).
    for b in range(2):
        tok = _resolve_tokens(token_lists[b], True)
        idx = [i for i in range(data_np[b].shape[0]) if tok[i] in NAME_TO_ID]
        xd = data_np[b][idx]
        nrm = np.linalg.norm(xd, axis=-1, keepdims=True)
        sim = (xd @ xd.T) / np.maximum(nrm * nrm.T, 1e-8)
        tgt = np.array([[1.0 if tok[idx[i]] == tok[idx[j]] else 0.0
                         for j in range(len(idx))] for i in range(len(idx))],
                       np.float32)
        ref = np.mean(np.maximum(sim, 0) - sim * tgt + np.log1p(np.exp(-np.abs(sim))))
        assert np.allclose(float(losses[b]), ref, rtol=1e-4, atol=1e-5), \
            (b, float(losses[b]), ref)

    # Single-sample path (mirrors CharacterLoss.forward call shape).
    l0 = character_loss_forward(data0, tokens0, use_youI=True)
    assert np.allclose(float(l0), float(losses[0]), rtol=1e-5, atol=1e-6)

    # Empty-selection path returns 0.0 on the host, like the reference.
    l_empty = character_loss_forward(data0, ["the"] * 16, use_youI=False)
    assert float(l_empty) == 0.0

    print("KERNEL_OK")
</pallas_src>

<mosaic_0001>
module attributes {stable_mosaic.version = 11 : i64} {
  func.func @char_loss_kernel(%arg0: i32, %arg1: memref<2xi32, #tpu.memory_space<smem>>, %arg2: memref<1x8x128xf32, #tpu.memory_space<vmem>>, %arg3: memref<1x8x1xi32, #tpu.memory_space<vmem>>, %arg4: memref<1x1x8xi32, #tpu.memory_space<vmem>>, %arg5: memref<1x1x128xf32, #tpu.memory_space<vmem>>) attributes {dimension_semantics = [#tpu.dimension_semantics<parallel>], iteration_bounds = array<i64: 2>, scalar_prefetch = 1 : i64, scratch_operands = 0 : i64, tpu.core_type = #tpu.core_type<tc>, window_params = [{transform_indices = @transform_0, window_bounds = array<i64: 1, 8, 128>}, {transform_indices = @transform_1, window_bounds = array<i64: 1, 8, 1>}, {transform_indices = @transform_2, window_bounds = array<i64: 1, 1, 8>}, {transform_indices = @transform_3, window_bounds = array<i64: 1, 1, 128>}]} {
    %0 = arith.index_cast %arg0 : i32 to index
    %1 = memref.load %arg1[%0] : memref<2xi32, #tpu.memory_space<smem>>
    %c0 = arith.constant 0 : index
    %c0_0 = arith.constant 0 : index
    %c0_1 = arith.constant 0 : index
    %2 = vector.load %arg2[%c0, %c0_0, %c0_1] : memref<1x8x128xf32, #tpu.memory_space<vmem>>, vector<1x8x128xf32>
    %3 = vector.shape_cast %2 : vector<1x8x128xf32> to vector<8x128xf32>
    %cst = arith.constant dense<0.000000e+00> : vector<8x8xf32>
    %4 = tpu.matmul %3, %3, %cst {dimension_numbers = #tpu.dot_dimension_numbers<[1], [1], [0], [0], [0, 0, 1, 0], [], []>} : vector<8x128xf32>, vector<8x128xf32>, vector<8x8xf32> -> vector<8x8xf32>
    %5 = tpu.iota {dimensions = array<i32: 0>} : vector<8x8xi32>
    %6 = tpu.iota {dimensions = array<i32: 1>} : vector<8x8xi32>
    %7 = arith.cmpi eq, %5, %6 : vector<8x8xi32>
    %cst_2 = arith.constant 0.000000e+00 : f32
    %8 = vector.broadcast %cst_2 : f32 to vector<8x8xf32>
    %9 = arith.select %7, %4, %8 : vector<8x8xi1>, vector<8x8xf32>
    %cst_3 = arith.constant dense<0.000000e+00> : vector<8xf32>
    %10 = vector.multi_reduction <add>, %9, %cst_3 [1] : vector<8x8xf32> to vector<8xf32>
    %11 = vector.shape_cast %10 : vector<8xf32> to vector<8x1xf32>
    %cst_4 = arith.constant dense<0.000000e+00> : vector<8xf32>
    %12 = vector.multi_reduction <add>, %9, %cst_4 [0] : vector<8x8xf32> to vector<8xf32>
    %13 = vector.shape_cast %12 : vector<8xf32> to vector<1x8xf32>
    %cst_5 = arith.constant 1.000000e-16 : f32
    %14 = vector.broadcast %cst_5 : f32 to vector<8x1xf32>
    %15 = arith.maximumf %11, %14 : vector<8x1xf32>
    %16 = math.rsqrt %15 : vector<8x1xf32>
    %cst_6 = arith.constant 1.000000e-16 : f32
    %17 = vector.broadcast %cst_6 : f32 to vector<1x8xf32>
    %18 = arith.maximumf %13, %17 : vector<1x8xf32>
    %19 = math.rsqrt %18 : vector<1x8xf32>
    %20 = vector.broadcast %16 : vector<8x1xf32> to vector<8x8xf32>
    %21 = arith.mulf %4, %20 : vector<8x8xf32>
    %22 = vector.broadcast %19 : vector<1x8xf32> to vector<8x8xf32>
    %23 = arith.mulf %21, %22 : vector<8x8xf32>
    %c0_7 = arith.constant 0 : index
    %c0_8 = arith.constant 0 : index
    %c0_9 = arith.constant 0 : index
    %24 = vector.load %arg3[%c0_7, %c0_8, %c0_9] : memref<1x8x1xi32, #tpu.memory_space<vmem>>, vector<1x8x1xi32>
    %25 = vector.shape_cast %24 : vector<1x8x1xi32> to vector<8x1xi32>
    %c0_10 = arith.constant 0 : index
    %c0_11 = arith.constant 0 : index
    %c0_12 = arith.constant 0 : index
    %26 = vector.load %arg4[%c0_10, %c0_11, %c0_12] : memref<1x1x8xi32, #tpu.memory_space<vmem>>, vector<1x1x8xi32>
    %27 = vector.shape_cast %26 : vector<1x1x8xi32> to vector<1x8xi32>
    %28 = vector.broadcast %25 : vector<8x1xi32> to vector<8x8xi32>
    %29 = vector.broadcast %27 : vector<1x8xi32> to vector<8x8xi32>
    %30 = arith.cmpi eq, %28, %29 : vector<8x8xi32>
    %31 = arith.extui %30 : vector<8x8xi1> to vector<8x8xi32>
    %32 = arith.sitofp %31 : vector<8x8xi32> to vector<8x8xf32>
    %cst_13 = arith.constant 0.000000e+00 : f32
    %33 = vector.broadcast %cst_13 : f32 to vector<8x8xf32>
    %34 = arith.maximumf %23, %33 : vector<8x8xf32>
    %35 = arith.mulf %23, %32 : vector<8x8xf32>
    %36 = arith.subf %34, %35 : vector<8x8xf32>
    %37 = math.absf %23 : vector<8x8xf32>
    %cst_14 = arith.constant 0.000000e+00 : f32
    %38 = vector.broadcast %cst_14 : f32 to vector<8x8xf32>
    %39 = arith.subf %38, %37 : vector<8x8xf32>
    %40 = math.exp %39 : vector<8x8xf32>
    %41 = math.log1p %40 : vector<8x8xf32>
    %42 = arith.addf %36, %41 : vector<8x8xf32>
    %43 = vector.broadcast %1 : i32 to vector<8x8xi32>
    %44 = arith.cmpi slt, %5, %43 : vector<8x8xi32>
    %45 = vector.broadcast %1 : i32 to vector<8x8xi32>
    %46 = arith.cmpi slt, %6, %45 : vector<8x8xi32>
    %47 = arith.andi %44, %46 : vector<8x8xi1>
    %cst_15 = arith.constant 0.000000e+00 : f32
    %48 = vector.broadcast %cst_15 : f32 to vector<8x8xf32>
    %49 = arith.select %47, %42, %48 : vector<8x8xi1>, vector<8x8xf32>
    %cst_16 = arith.constant dense<0.000000e+00> : vector<8xf32>
    %50 = vector.multi_reduction <add>, %49, %cst_16 [1] : vector<8x8xf32> to vector<8xf32>
    %51 = vector.shape_cast %50 : vector<8xf32> to vector<8x1xf32>
    %cst_17 = arith.constant dense<0.000000e+00> : vector<1xf32>
    %52 = vector.multi_reduction <add>, %51, %cst_17 [0] : vector<8x1xf32> to vector<1xf32>
    %53 = vector.shape_cast %52 : vector<1xf32> to vector<1x1xf32>
    %54 = arith.sitofp %1 : i32 to f32
    %55 = arith.mulf %54, %54 : f32
    %56 = vector.broadcast %55 : f32 to vector<1x1xf32>
    %57 = arith.divf %53, %56 : vector<1x1xf32>
    %58 = vector.shape_cast %57 : vector<1x1xf32> to vector<1x1x1xf32>
    %59 = vector.shape_cast %58 : vector<1x1x1xf32> to vector<1x1x1xf32>
    %60 = vector.broadcast %59 : vector<1x1x1xf32> to vector<1x1x128xf32>
    %c0_18 = arith.constant 0 : index
    %c0_19 = arith.constant 0 : index
    %c0_20 = arith.constant 0 : index
    %61 = vector.load %arg5[%c0_18, %c0_19, %c0_20] : memref<1x1x128xf32, #tpu.memory_space<vmem>>, vector<1x1x128xf32>
    tpu.vector_store %arg5[%c0_18, %c0_19, %c0_20], %60 {strides = array<i32>} : memref<1x1x128xf32, #tpu.memory_space<vmem>>, vector<1x1x128xf32>,
    return
  }
  func.func @transform_0(%arg0: i32, %arg1: memref<2xi32, #tpu.memory_space<smem>>) -> (i32, i32, i32) {
    %c0_i32 = arith.constant 0 : i32
    %c0_i32_0 = arith.constant 0 : i32
    %c0_i32_1 = arith.constant 0 : i32
    return %arg0, %c0_i32, %c0_i32_0 : i32, i32, i32
  }
  func.func @transform_1(%arg0: i32, %arg1: memref<2xi32, #tpu.memory_space<smem>>) -> (i32, i32, i32) {
    %c0_i32 = arith.constant 0 : i32
    %c0_i32_0 = arith.constant 0 : i32
    %c0_i32_1 = arith.constant 0 : i32
    return %arg0, %c0_i32, %c0_i32_0 : i32, i32, i32
  }
  func.func @transform_2(%arg0: i32, %arg1: memref<2xi32, #tpu.memory_space<smem>>) -> (i32, i32, i32) {
    %c0_i32 = arith.constant 0 : i32
    %c0_i32_0 = arith.constant 0 : i32
    %c0_i32_1 = arith.constant 0 : i32
    return %arg0, %c0_i32, %c0_i32_0 : i32, i32, i32
  }
  func.func @transform_3(%arg0: i32, %arg1: memref<2xi32, #tpu.memory_space<smem>>) -> (i32, i32, i32) {
    %c0_i32 = arith.constant 0 : i32
    %c0_i32_0 = arith.constant 0 : i32
    %c0_i32_1 = arith.constant 0 : i32
    return %arg0, %c0_i32, %c0_i32_0 : i32, i32, i32
  }
}

</mosaic_0001>

<llo_original>
// kernel: _lambda_.1
$region0: #{_lambda_.1}
  #allocation0 [shape = 'u32[]', space=smem, size = 0x4, offset = 0x4, fixed_abs, tag = 'smem constant byte address 0x4 - core index']
  #allocation1 [shape = 'u32[144,128]{1,0:T(1,128)}', space=vmem, size = 0x12000, scoped, tag = 'internal scratch']
  #allocation2 [shape = 's32[1]{0}', space=sflag, size = 0x4, scoped, tag = 'scoped memory for _lambda_.1']
  #allocation3 [shape = 'u8[512]{0}', space=smem, size = 0x200, scoped, tag = 'prefetched SMEM operand 0']
  %s0 = inlined_call_operand.vmem [shape: s32[2], index: 0, kind: input, shape index: {}]
  %s1 = inlined_call_operand.vmem [shape: f32[2,8,128], index: 1, kind: input, shape index: {}]
  %s2 = inlined_call_operand.vmem [shape: s32[2,8,1], index: 2, kind: input, shape index: {}]
  %s3 = inlined_call_operand.vmem [shape: s32[2,1,8], index: 3, kind: input, shape index: {}]
  %s4 = inlined_call_operand.vmem [shape: f32[2,1,128], index: 4, kind: output, shape index: {}]
  %s5 = sld [smem:[#allocation0]]
  $region45: #{_lambda_.1} parent=0
    _
  %s7 = ssub.s32 1, %s5
  %s8 = scalar_select 0, %s7, %s5
  %s9 = sshll.u32 %s0, 4
  %s10 = int_to_ptr.vmem [resolvable:$true] %s9
  %12 = dma.vmem_to_smem %s10, 16, [#allocation3], [#allocation2]
  %13 = dma.done [#allocation2], 16
  %14 = sfence
  loop: start=0, step=1, limit=4
  $region2: #{_lambda_.1} parent=0 // loop_pre_header
    _
  $region3: #{_lambda_.1} parent=0 // loop_header
    %s16 = sphi 0, %s20
    %p17 = scmp.ge.s32.totalorder %s16, 4
    %s26 = sphi 0, %s28
    %s29 = sphi 0, %s26
    %s30 = sphi 0, %s29
    %s46 = sphi 0, %s30
    %s52 = sphi 0, %s54
    %s55 = sphi 0, %s52
    %s56 = sphi 0, %s55
    %s72 = sphi 0, %s56
    %s78 = sphi 0, %s80
    %s81 = sphi 0, %s78
    %s82 = sphi 0, %s81
    %s98 = sphi 0, %s82
    %s104 = sphi 0, %s106
    %s107 = sphi 0, %s104
    %s108 = sphi 0, %s107
    %s124 = sphi 0, %s108
  $region4: #{_lambda_.1} parent=0 // loop_header_branch
    %19 = sbr.rel (%p17) target = $region8
  $region5: #{_lambda_.1} parent=0 // loop_body
    %s21 = ssub.s32 %s16, 1
    %s22 = ssub.s32 %s16, 2
    %s23 = sadd.s32 %s16, 1
    %s24 = ssub.s32 %s16, %s23
    %p25 = scmp.eq.s32.totalorder %s24, 0
    %s27 = sadd.s32 %s26, 1
    %s28 = scalar_select %p25, %s26, %s27
    %p31 = pneg %p25
    %p32 = scmp.eq.s32.totalorder %s16, 1
    %p33 = por %p31, %p32
    %p34 = scmp.ne.s32.totalorder %s26, %s29
    %p35 = scmp.eq.s32.totalorder %s16, 0
    %p36 = por %p34, %p35
    %p37 = scmp.ne.s32.totalorder %s26, %s29
    %p38 = scmp.eq.s32.totalorder %s21, 1
    %p39 = por %p37, %p38
    %p40 = scmp.ne.s32.totalorder %s29, %s30
    %p41 = scmp.eq.s32.totalorder %s21, 0
    %p42 = por %p40, %p41
    %p43 = scmp.ne.s32.totalorder %s29, %s30
    %p44 = scmp.eq.s32.totalorder %s22, 1
    %p45 = por %p43, %p44
    %p47 = scmp.ne.s32.totalorder %s30, %s46
    %p48 = scmp.eq.s32.totalorder %s22, 0
    %p49 = por %p47, %p48
    %s50 = ssub.s32 %s16, %s23
    %p51 = scmp.eq.s32.totalorder %s50, 0
    %s53 = sadd.s32 %s52, 1
    %s54 = scalar_select %p51, %s52, %s53
    %p57 = pneg %p51
    %p58 = scmp.eq.s32.totalorder %s16, 1
    %p59 = por %p57, %p58
    %p60 = scmp.ne.s32.totalorder %s52, %s55
    %p61 = scmp.eq.s32.totalorder %s16, 0
    %p62 = por %p60, %p61
    %p63 = scmp.ne.s32.totalorder %s52, %s55
    %p64 = scmp.eq.s32.totalorder %s21, 1
    %p65 = por %p63, %p64
    %p66 = scmp.ne.s32.totalorder %s55, %s56
    %p67 = scmp.eq.s32.totalorder %s21, 0
    %p68 = por %p66, %p67
    %p69 = scmp.ne.s32.totalorder %s55, %s56
    %p70 = scmp.eq.s32.totalorder %s22, 1
    %p71 = por %p69, %p70
    %p73 = scmp.ne.s32.totalorder %s56, %s72
    %p74 = scmp.eq.s32.totalorder %s22, 0
    %p75 = por %p73, %p74
    %s76 = ssub.s32 %s16, %s23
    %p77 = scmp.eq.s32.totalorder %s76, 0
    %s79 = sadd.s32 %s78, 1
    %s80 = scalar_select %p77, %s78, %s79
    %p83 = pneg %p77
    %p84 = scmp.eq.s32.totalorder %s16, 1
    %p85 = por %p83, %p84
    %p86 = scmp.ne.s32.totalorder %s78, %s81
    %p87 = scmp.eq.s32.totalorder %s16, 0
    %p88 = por %p86, %p87
    %p89 = scmp.ne.s32.totalorder %s78, %s81
    %p90 = scmp.eq.s32.totalorder %s21, 1
    %p91 = por %p89, %p90
    %p92 = scmp.ne.s32.totalorder %s81, %s82
    %p93 = scmp.eq.s32.totalorder %s21, 0
    %p94 = por %p92, %p93
    %p95 = scmp.ne.s32.totalorder %s81, %s82
    %p96 = scmp.eq.s32.totalorder %s22, 1
    %p97 = por %p95, %p96
    %p99 = scmp.ne.s32.totalorder %s82, %s98
    %p100 = scmp.eq.s32.totalorder %s22, 0
    %p101 = por %p99, %p100
    %s102 = ssub.s32 %s16, %s23
    %p103 = scmp.eq.s32.totalorder %s102, 0
    %s105 = sadd.s32 %s104, 1
    %s106 = scalar_select %p103, %s104, %s105
    %p109 = pneg %p103
    %p110 = scmp.eq.s32.totalorder %s16, 1
    %p111 = por %p109, %p110
    %p112 = scmp.ne.s32.totalorder %s104, %s107
    %p113 = scmp.eq.s32.totalorder %s16, 0
    %p114 = por %p112, %p113
    %p115 = scmp.ne.s32.totalorder %s104, %s107
    %p116 = scmp.eq.s32.totalorder %s21, 1
    %p117 = por %p115, %p116
    %p118 = scmp.ne.s32.totalorder %s107, %s108
    %p119 = scmp.eq.s32.totalorder %s21, 0
    %p120 = por %p118, %p119
    %p121 = scmp.ne.s32.totalorder %s107, %s108
    %p122 = scmp.eq.s32.totalorder %s22, 1
    %p123 = por %p121, %p122
    %p125 = scmp.ne.s32.totalorder %s108, %s124
    %p126 = scmp.eq.s32.totalorder %s22, 0
    %p127 = por %p125, %p126
    %p128 = scmp.le.s32.totalorder 1, %s16
    %p129 = scmp.lt.s32.totalorder %s16, 3
    %p130 = pnand %p128, %p129
    %p131 = pneg %p130
    // Predicated region
    $region9: #{_lambda_.1} parent=5 // pred_check
      _
    $region10: #{_lambda_.1} parent=5 // pred_check_branch
      %133 = sbr.rel (%p130) target = $region12
    $region11: #{_lambda_.1} parent=5 // pred_region
      %s134 = ssub.s32 %s16, 1
    $region12: #{_lambda_.1} parent=5 // pred_fallthru
      _
    %p135 = scmp.lt.s32.totalorder %s16, 2
    // Predicated region
    $region13: #{_lambda_.1} parent=5 // pred_check
      %p136 = pneg %p135
    $region14: #{_lambda_.1} parent=5 // pred_check_branch
      %138 = sbr.rel (%p136) target = $region16
    $region15: #{_lambda_.1} parent=5 // pred_region
      // Predicated region
      $region17: #{_lambda_.1} parent=15 // pred_check
        %p139 = pneg %p36
      $region18: #{_lambda_.1} parent=15 // pred_check_branch
        %141 = sbr.rel (%p139) target = $region20
      $region19: #{_lambda_.1} parent=15 // pred_region
        %p142 = scmp.lt.s32.totalorder %s16, 1
        %s143 = scalar_select %p142, %s16, 1
        %s144 = smul.addr %s143, 8
        %s145 = scalar_lea.vmem %s1, %s144
      $region20: #{_lambda_.1} parent=15 // pred_fallthru
        _
      // Predicated region
      $region21: #{_lambda_.1} parent=15 // pred_check
        %p146 = pneg %p62
      $region22: #{_lambda_.1} parent=15 // pred_check_branch
        %148 = sbr.rel (%p146) target = $region24
      $region23: #{_lambda_.1} parent=15 // pred_region
        %p149 = scmp.lt.s32.totalorder %s16, 1
        %s150 = scalar_select %p149, %s16, 1
        %s151 = smul.addr %s150, 8
        %s152 = scalar_lea.vmem %s2, %s151
      $region24: #{_lambda_.1} parent=15 // pred_fallthru
        _
      // Predicated region
      $region25: #{_lambda_.1} parent=15 // pred_check
        %p153 = pneg %p88
      $region26: #{_lambda_.1} parent=15 // pred_check_branch
        %155 = sbr.rel (%p153) target = $region28
      $region27: #{_lambda_.1} parent=15 // pred_region
        %p156 = scmp.lt.s32.totalorder %s16, 1
        %s157 = scalar_select %p156, %s16, 1
        %s158 = scalar_lea.vmem %s3, %s157
      $region28: #{_lambda_.1} parent=15 // pred_fallthru
        _
    $region16: #{_lambda_.1} parent=5 // pred_fallthru
      _
    %p159 = scmp.le.s32.totalorder 1, %s16
    %p160 = scmp.lt.s32.totalorder %s16, 3
    %p161 = pnand %p159, %p160
    %p162 = pneg %p161
    // Predicated region
    $region29: #{_lambda_.1} parent=5 // pred_check
      _
    $region30: #{_lambda_.1} parent=5 // pred_check_branch
      %164 = sbr.rel (%p161) target = $region32
    $region31: #{_lambda_.1} parent=5 // pred_region
      %s165 = ssub.s32 %s16, 1
      %p166 = scmp.lt.s32.totalorder %s21, 1
      %s167 = scalar_select %p166, %s21, 1
      %s168 = smul.addr %s167, 8
      %s169 = scalar_lea.vmem %s1, %s168
      %p170 = pneg %p42
      %p171 = pneg %p39
      %p172 = scmp.lt.s32.totalorder %s21, 1
      %s173 = scalar_select %p172, %s21, 1
      %s174 = smul.addr %s173, 8
      %s175 = scalar_lea.vmem %s2, %s174
      %p176 = pneg %p68
      %p177 = pneg %p65
      %p178 = scmp.lt.s32.totalorder %s21, 1
      %s179 = scalar_select %p178, %s21, 1
      %s180 = scalar_lea.vmem %s3, %s179
      %p181 = pneg %p94
      %p182 = pneg %p91
      %p183 = pneg %p120
      %p184 = pneg %p117
      %p185 = scmp.lt.s32.totalorder %s21, 1
      %s186 = scalar_select %p185, %s21, 1
      %s187 = scalar_lea.vmem %s4, %s186
      %p188 = scmp.lt.s32.totalorder %s21, 1
      %s189 = scalar_select %p188, %s21, 1
      %s190 = smul.addr %s189, 8
      %s191 = scalar_lea.vmem %s1, %s190
      %p192 = scmp.lt.s32.totalorder %s21, 1
      %s193 = scalar_select %p192, %s21, 1
      %s194 = smul.addr %s193, 8
      %s195 = scalar_lea.vmem %s2, %s194
      %p196 = scmp.lt.s32.totalorder %s21, 1
      %s197 = scalar_select %p196, %s21, 1
      %s198 = scalar_lea.vmem %s3, %s197
      %p199 = scmp.lt.s32.totalorder %s21, 1
      %s200 = scalar_select %p199, %s21, 1
      %s201 = scalar_lea.vmem %s4, %s200
      %s202 = sld [smem:[#allocation3 + %s21]]
      %v203 = vld [vmem:[%s191] sm:$0xff]
      %204 = vmatprep.subr.mxu0 0.0
      %205 = vmatpush1.xpose.msra.mxu0 %v203
      %206 = vmatprep.subr.mxu0 0.0
      %207 = vmatpush1.xpose.msra.mxu0 0.0
      %208 = vmatprep.subr.mxu0 0.0
      %209 = vmatpush1.xpose.msra.mxu0 0.0
      %210 = vmatprep.subr.mxu0 0.0
      %211 = vmatpush1.xpose.msra.mxu0 0.0
      %212 = vmatprep.subr.mxu0 0.0
      %213 = vmatpush1.xpose.msra.mxu0 0.0
      %214 = vmatprep.subr.mxu0 0.0
      %215 = vmatpush1.xpose.msra.mxu0 0.0
      %216 = vmatprep.subr.mxu0 0.0
      %217 = vmatpush1.xpose.msra.mxu0 0.0
      %218 = vmatprep.subr.mxu0 0.0
      %219 = vmatpush1.xpose.msra.mxu0 0.0
      %220 = vmatprep.subr.mxu0 0.0
      %221 = vmatpush1.xpose.msra.mxu0 0.0
      %222 = vmatprep.subr.mxu0 0.0
      %223 = vmatpush1.xpose.msra.mxu0 0.0
      %224 = vmatprep.subr.mxu0 0.0
      %225 = vmatpush1.xpose.msra.mxu0 0.0
      %226 = vmatprep.subr.mxu0 0.0
      %227 = vmatpush1.xpose.msra.mxu0 0.0
      %228 = vmatprep.subr.mxu0 0.0
      %229 = vmatpush1.xpose.msra.mxu0 0.0
      %230 = vmatprep.subr.mxu0 0.0
      %231 = vmatpush1.xpose.msra.mxu0 0.0
      %232 = vmatprep.subr.mxu0 0.0
      %233 = vmatpush1.xpose.msra.mxu0 0.0
      %234 = vmatprep.subr.mxu0 0.0
      %235 = vmatpush1.xpose.msra.mxu0 0.0
      %236 = vmatprep.subr.mxu0 0.0
      %237 = vmatpush1.xpose.msra.mxu0 0.0
      %238 = vmatprep.subr.mxu0 0.0
      %239 = vmatpush1.xpose.msra.mxu0 0.0
      %240 = vmatprep.subr.mxu0 0.0
      %241 = vmatpush1.xpose.msra.mxu0 0.0
      %242 = vmatprep.subr.mxu0 0.0
      %243 = vmatpush1.xpose.msra.mxu0 0.0
      %244 = vmatprep.subr.mxu0 0.0
      %245 = vmatpush1.xpose.msra.mxu0 0.0
      %246 = vmatprep.subr.mxu0 0.0
      %247 = vmatpush1.xpose.msra.mxu0 0.0
      %248 = vmatprep.subr.mxu0 0.0
      %249 = vmatpush1.xpose.msra.mxu0 0.0
      %250 = vmatprep.subr.mxu0 0.0
      %251 = vmatpush1.xpose.msra.mxu0 0.0
      %252 = vmatprep.subr.mxu0 0.0
      %253 = vmatpush1.xpose.msra.mxu0 0.0
      %254 = vmatprep.subr.mxu0 0.0
      %255 = vmatpush1.xpose.msra.mxu0 0.0
      %256 = vmatprep.subr.mxu0 0.0
      %257 = vmatpush1.xpose.msra.mxu0 0.0
      %258 = vmatprep.subr.mxu0 0.0
      %259 = vmatpush1.xpose.msra.mxu0 0.0
      %260 = vmatprep.subr.mxu0 0.0
      %261 = vmatpush1.xpose.msra.mxu0 0.0
      %262 = vmatprep.subr.mxu0 0.0
      %263 = vmatpush1.xpose.msra.mxu0 0.0
      %264 = vmatprep.subr.mxu0 0.0
      %265 = vmatpush1.xpose.msra.mxu0 0.0
      %266 = vmatprep.subr.mxu0 0.0
      %267 = vmatpush1.xpose.msra.mxu0 0.0
      %268 = vmatprep.mubr.f32.mxu0 0.0
      %269 = vmatmul.mubr.f32.gmra.mrb[0].mxu0 %v203
      %v270 = vpop.f32.mrb[0].mxu0
      %v271 = vadd.f32 0.0, %v270
      %v272 = vpop.f32.mrb[0].mxu0
      %273 = vdwg.mxu0
      %v274 = vlaneseq
      %v275 = vshrl.u32 %v274, 7
      %v276 = vlaneseq
      %v277 = vand.u32 %v276, 127
      %vm278 = vcmp.eq.s32.totalorder %v275, %v277
      %v279 = vsel %vm278, %v271, 0.0
      %vm280 = vcmask 64512
      %v281 = vsel %vm280, %v279, 0.0
      %282 = vadd.xlane.f32.xlu0 %v281
      %v283 = vpop.xlane.xlu0 %282
      %v284 = vrot.slane %v281, 4
      %v285 = vadd.f32 %v281, %v284
      %v286 = vrot.slane %v285, 2
      %v287 = vadd.f32 %v285, %v286
      %v288 = vrot.slane %v287, 1
      %v289 = vadd.f32 %v287, %v288
      %v290 = vmax.f32 %v283, 1e-16
      %v291 = vrsqrt.pop %v290
      %v292 = vmax.f32 %v289, 1e-16
      %v293 = vrsqrt.pop %v292
      %v294 = vmul.f32 %v271, %v291
      %v295 = vmul.f32 %v294, %v293
      %v296 = vld [vmem:[%s195] sm:$0xff]
      %v297 = vld [vmem:[%s198] sm:$0x1]
      %298 = vset.pattern.permute.xlu0 0
      %299 = vperm.xlu0 %298, %v296
      %v300 = vpop.permute.xlu0 %299
      %v301 = vlaneseq
      %v302 = vshrl.u32 %v301, 7
      %v303 = vsub.s32 0, %v302
      %v304 = vrot.slane %v297, %v303
      %vm305 = vcmp.eq.s32.totalorder %v300, %v304
      %v306 = vsel %vm305, 1, 0
      %v307 = vcvt.s32.f32 %v306
      %v308 = vmax.f32 %v295, 0.0
      %v309 = vmul.f32 %v295, %v307
      %v310 = vsub.f32 %v308, %v309
      %v311 = vand.u32 2147483647, %v295
      %v312 = vsub.f32 0.0, %v311
      %v313 = vmul.f32 %v312, 1.442695
      %v314 = vpow.pop %v313
      %v315 = vadd.f32 %v314, 1.0
      %v316 = vlog2.pop %v315
      %v317 = vmul.f32 %v316, 0.6931472
      %v318 = vmul.f32 -0.5, %v314
      %v319 = vadd.f32 %v318, 1.0
      %v320 = vmul.f32 %v319, %v314
      %v321 = vand.u32 2147483647, %v314
      %vm322 = vcmp.lt.f32.partialorder %v321, 0.0004427343
      %v323 = vsel %vm322, %v320, %v317
      %v324 = vadd.f32 %v310, %v323
      %v325 = vstv %s202
      %vm326 = vcmp.lt.s32.totalorder %v275, %v325
      %vm327 = vcmp.lt.s32.totalorder %v277, %v325
      %vm328 = vmand %vm326, %vm327
      %v329 = vsel %vm328, %v324, 0.0
      %v330 = vsel %vm280, %v329, 0.0
      %331 = vadd.xlane.f32.xlu0 %v330
      %v332 = vpop.xlane.xlu0 %331
      %v333 = vrot.slane %v332, 4
      %v334 = vadd.f32 %v332, %v333
      %v335 = vrot.slane %v334, 2
      %v336 = vadd.f32 %v334, %v335
      %v337 = vrot.slane %v336, 1
      %v338 = vadd.f32 %v336, %v337
      %s339 = scvt.s32.f32 %s202
      %s340 = smul.f32 %s339, %s339
      %v341 = vstv %s340
      %v342 = vrcp.pop %v341
      %v343 = vmul.f32 %v338, %v342
      %344 = vst [vmem:[%s201] sm:$0x1] %v343
      %p345 = scmp.lt.s32.totalorder %s21, 1
      %s346 = scalar_select %p345, %s21, 1
      %s347 = scalar_lea.vmem %s4, %s346
      // Predicated region
      $region33: #{_lambda_.1} parent=31 // pred_check
        %p348 = pneg %p117
      $region34: #{_lambda_.1} parent=31 // pred_check_branch
        %350 = sbr.rel (%p348) target = $region36
      $region35: #{_lambda_.1} parent=31 // pred_region
        _
      $region36: #{_lambda_.1} parent=31 // pred_fallthru
        _
    $region32: #{_lambda_.1} parent=5 // pred_fallthru
      _
    %p351 = scmp.le.s32.totalorder 2, %s16
    // Predicated region
    $region37: #{_lambda_.1} parent=5 // pred_check
      %p352 = pneg %p351
    $region38: #{_lambda_.1} parent=5 // pred_check_branch
      %354 = sbr.rel (%p352) target = $region40
    $region39: #{_lambda_.1} parent=5 // pred_region
      %s355 = ssub.s32 %s16, 2
      // Predicated region
      $region41: #{_lambda_.1} parent=39 // pred_check
        %p356 = pneg %p123
      $region42: #{_lambda_.1} parent=39 // pred_check_branch
        %358 = sbr.rel (%p356) target = $region44
      $region43: #{_lambda_.1} parent=39 // pred_region
        %p359 = scmp.lt.s32.totalorder %s22, 1
        %s360 = scalar_select %p359, %s22, 1
        %s361 = scalar_lea.vmem %s4, %s360
      $region44: #{_lambda_.1} parent=39 // pred_fallthru
        _
    $region40: #{_lambda_.1} parent=5 // pred_fallthru
      _
  $region6: #{_lambda_.1} parent=0 // loop_footer
    %s20 = sadd.s32 1, %s16
  $region7: #{_lambda_.1} parent=0 // loop_footer_branch
    %15 = sbr.rel target = $region3
  $region8: #{_lambda_.1} parent=0 // loop_exit
    _

</llo_original>
